<compile_context>
chip_gen: v6e
topology: v6e:2x2x1
jax: 0.10.0
libtpu: 0.0.40
codegen_flags: <defaults>
</compile_context>

<pallas_src>
import functools

import jax
import jax.numpy as jnp
from jax.experimental import pallas as pl
from jax.experimental.pallas import tpu as pltpu


def _make_vpu_kernel(cin, cout):
    """BN + ReLU + 1x1 conv for small channel counts (conv on the VPU)."""

    def kernel(x_ref, params_ref, w_ref, o_ref):
        # x_ref:      (1, Cin, TS)   pixels on the lane axis
        # params_ref: (Cin, 2)       [:,0]=scale, [:,1]=shift  (VMEM)
        # w_ref:      (Cout*Cin,)    flattened conv weight     (SMEM scalars)
        # o_ref:      (1, Cout, TS)
        x = x_ref[0].astype(jnp.float32)            # (Cin, TS)
        scale = params_ref[:, 0:1]                  # (Cin, 1) -> lane broadcast
        shift = params_ref[:, 1:2]
        h = jnp.maximum(x * scale + shift, 0.0)     # BatchNorm + ReLU
        for co in range(cout):                      # unrolled VPU MACs
            acc = w_ref[co * cin] * h[0:1, :]
            for ci in range(1, cin):
                acc = acc + w_ref[co * cin + ci] * h[ci:ci + 1, :]
            o_ref[0, co:co + 1, :] = acc.astype(o_ref.dtype)

    return kernel


def _make_mxu_kernel():
    """BN + ReLU + 1x1 conv for large channel counts (conv on the MXU)."""

    def kernel(x_ref, params_ref, w_ref, o_ref):
        # w_ref: (Cout, Cin) in VMEM
        x = x_ref[0].astype(jnp.float32)            # (Cin, TS)
        scale = params_ref[:, 0:1]
        shift = params_ref[:, 1:2]
        h = jnp.maximum(x * scale + shift, 0.0)
        o_ref[0] = jnp.dot(
            w_ref[...], h, preferred_element_type=jnp.float32
        ).astype(o_ref.dtype)

    return kernel


def _avg_pool2d(y, kernel_size, stride):
    """PyTorch-style avg_pool2d (padding=0, ceil_mode=False) in plain JAX."""
    k, s = int(kernel_size), int(stride)
    summed = jax.lax.reduce_window(
        y,
        jnp.array(0.0, y.dtype),
        jax.lax.add,
        window_dimensions=(1, 1, k, k),
        window_strides=(1, 1, s, s),
        padding="VALID",
    )
    return summed / float(k * k)


@functools.partial(jax.jit, static_argnames=("kernel_size", "stride", "eps"))
def transition_forward(x, gamma, beta, running_mean, running_var, conv_w,
                       kernel_size, stride, eps=1e-5):
    """x: (N, Cin, H, W) NCHW; conv_w: (Cout, Cin, 1, 1) or (Cout, Cin)."""
    N, Cin, H, W = x.shape
    Cout = conv_w.shape[0]
    HW = H * W

    # ---- fold BN stats into a single (Cin, 2) scale/shift operand ----
    scale = gamma / jnp.sqrt(running_var + eps)
    shift = beta - running_mean * scale
    params = jnp.stack([scale, shift], axis=1).astype(jnp.float32)   # (Cin, 2)
    w2 = conv_w.reshape(Cout, Cin).astype(jnp.float32)               # (Cout, Cin)

    # Keep NCHW: only collapse (H, W) -> HW (metadata reshape, no HBM pass).
    x3 = x.reshape(N, Cin, HW)

    # ---- pixel tile (lane) size: big, but inside a conservative VMEM budget ----
    vmem_budget = 8 * 1024 * 1024                 # pipelined-block budget (bytes)
    bytes_per_pixel = 4 * (Cin + Cout) * 2        # double-buffered in + out
    cap = max(128, (vmem_budget // bytes_per_pixel) // 128 * 128)
    max_lanes = min(4096, cap)
    TS = HW if HW <= max_lanes else max_lanes     # ==HW or a multiple of 128
    grid = (N, pl.cdiv(HW, TS))                   # partial last tile is masked

    # ---- choose conv path: VPU scalar-MACs for tiny channels, MXU otherwise ----
    use_mxu = (Cin * Cout) > 4096
    if use_mxu:
        kernel = _make_mxu_kernel()
        w_arg = w2
        w_spec = pl.BlockSpec((Cout, Cin), lambda n, p: (0, 0))
    else:
        kernel = _make_vpu_kernel(Cin, Cout)
        w_arg = w2.reshape(-1)                    # (Cout*Cin,) scalars in SMEM
        w_spec = pl.BlockSpec(memory_space=pltpu.MemorySpace.SMEM)

    out3 = pl.pallas_call(
        kernel,
        out_shape=jax.ShapeDtypeStruct((N, Cout, HW), jnp.float32),
        grid=grid,
        in_specs=[
            pl.BlockSpec((1, Cin, TS), lambda n, p: (n, 0, p)),   # x tile
            pl.BlockSpec((Cin, 2), lambda n, p: (0, 0)),          # scale/shift
            w_spec,                                               # conv weight
        ],
        out_specs=pl.BlockSpec((1, Cout, TS), lambda n, p: (n, 0, p)),
        compiler_params=pltpu.CompilerParams(
            dimension_semantics=("parallel", "parallel")),
    )(x3, params, w_arg)

    y = out3.reshape(N, Cout, H, W)               # metadata reshape only
    return _avg_pool2d(y, kernel_size, stride)


def _reference(x, gamma, beta, running_mean, running_var, conv_w,
               kernel_size, stride, eps=1e-5):
    """Plain-JAX reference matching PyTorch eval-mode Transition.forward."""
    n, c, h, w = x.shape
    co = conv_w.shape[0]
    inv_std = 1.0 / jnp.sqrt(running_var + eps)
    xn = (x - running_mean.reshape(1, c, 1, 1)) * inv_std.reshape(1, c, 1, 1)
    xn = xn * gamma.reshape(1, c, 1, 1) + beta.reshape(1, c, 1, 1)
    xn = jnp.maximum(xn, 0.0)
    y = jnp.einsum("nchw,oc->nohw", xn, conv_w.reshape(co, c))
    k, s = int(kernel_size), int(stride)
    ho = (h - k) // s + 1
    wo = (w - k) // s + 1
    acc = jnp.zeros((n, co, ho, wo), y.dtype)
    for di in range(k):
        for dj in range(k):
            acc = acc + y[:, :, di:di + s * ho:s, dj:dj + s * wo:s]
    return acc / float(k * k)


if __name__ == "__main__":
    # Small shapes consistent with the module: nChannels=4, nOutChannels=8.
    N, Cin, H, W = 2, 4, 16, 16
    Cout = 8
    pool_k, pool_s = 2, 2

    key = jax.random.PRNGKey(0)
    kx, kg, kb, km, kv, kw = jax.random.split(key, 6)

    x = jax.random.normal(kx, (N, Cin, H, W), dtype=jnp.float32)
    gamma = jax.random.normal(kg, (Cin,), dtype=jnp.float32) * 0.1 + 1.0
    beta = jax.random.normal(kb, (Cin,), dtype=jnp.float32) * 0.1
    running_mean = jax.random.normal(km, (Cin,), dtype=jnp.float32) * 0.1
    running_var = jax.random.uniform(kv, (Cin,), dtype=jnp.float32,
                                     minval=0.5, maxval=1.5)
    conv_w = jax.random.normal(kw, (Cout, Cin, 1, 1), dtype=jnp.float32) * 0.2

    out = transition_forward(x, gamma, beta, running_mean, running_var, conv_w,
                             kernel_size=pool_k, stride=pool_s)
    out = jax.block_until_ready(out)

    ref = _reference(x, gamma, beta, running_mean, running_var, conv_w,
                     pool_k, pool_s)
    h_out = (H - pool_k) // pool_s + 1
    w_out = (W - pool_k) // pool_s + 1
    assert out.shape == (N, Cout, h_out, w_out), out.shape
    max_err = float(jnp.max(jnp.abs(out - ref)))
    assert jnp.allclose(out, ref, atol=1e-4, rtol=1e-4), max_err

    print("KERNEL_OK")
</pallas_src>

<mosaic_0001>
module attributes {stable_mosaic.version = 11 : i64} {
  func.func @kernel(%arg0: i32, %arg1: i32, %arg2: memref<1x4x256xf32, #tpu.memory_space<vmem>>, %arg3: memref<4x2xf32, #tpu.memory_space<vmem>>, %arg4: memref<32xf32, #tpu.memory_space<smem>>, %arg5: memref<1x8x256xf32, #tpu.memory_space<vmem>>) attributes {dimension_semantics = [#tpu.dimension_semantics<parallel>, #tpu.dimension_semantics<parallel>], iteration_bounds = array<i64: 2, 1>, scalar_prefetch = 0 : i64, scratch_operands = 0 : i64, tpu.core_type = #tpu.core_type<tc>, window_params = [{transform_indices = @transform_0, window_bounds = array<i64: 1, 4, 256>}, {pipeline_mode = #tpu.pipeline_mode<synchronous>, transform_indices = @transform_1, window_bounds = array<i64: 4, 2>}, {transform_indices = @transform_2, window_bounds = array<i64: 32>}, {transform_indices = @transform_3, window_bounds = array<i64: 1, 8, 256>}]} {
    %c0 = arith.constant 0 : index
    %c0_0 = arith.constant 0 : index
    %c0_1 = arith.constant 0 : index
    %0 = vector.load %arg2[%c0, %c0_0, %c0_1] : memref<1x4x256xf32, #tpu.memory_space<vmem>>, vector<1x4x256xf32>
    %1 = vector.shape_cast %0 : vector<1x4x256xf32> to vector<4x256xf32>
    %c0_2 = arith.constant 0 : index
    %c0_3 = arith.constant 0 : index
    %2 = vector.load %arg3[%c0_2, %c0_3] : memref<4x2xf32, #tpu.memory_space<vmem>>, vector<4x1xf32>
    %c0_4 = arith.constant 0 : index
    %c1 = arith.constant 1 : index
    %3 = vector.load %arg3[%c0_4, %c1] : memref<4x2xf32, #tpu.memory_space<vmem>>, vector<4x1xf32>
    %4 = vector.broadcast %2 : vector<4x1xf32> to vector<4x256xf32>
    %5 = arith.mulf %1, %4 : vector<4x256xf32>
    %6 = vector.broadcast %3 : vector<4x1xf32> to vector<4x256xf32>
    %7 = arith.addf %5, %6 : vector<4x256xf32>
    %cst = arith.constant 0.000000e+00 : f32
    %8 = vector.broadcast %cst : f32 to vector<4x256xf32>
    %9 = arith.maximumf %7, %8 : vector<4x256xf32>
    %c0_5 = arith.constant 0 : index
    %10 = memref.load %arg4[%c0_5] : memref<32xf32, #tpu.memory_space<smem>>
    %11 = vector.extract_strided_slice %9 {offsets = [0, 0], sizes = [1, 256], strides = [1, 1]} : vector<4x256xf32> to vector<1x256xf32>
    %12 = vector.broadcast %10 : f32 to vector<1x256xf32>
    %13 = arith.mulf %12, %11 : vector<1x256xf32>
    %c1_6 = arith.constant 1 : index
    %14 = memref.load %arg4[%c1_6] : memref<32xf32, #tpu.memory_space<smem>>
    %15 = vector.extract_strided_slice %9 {offsets = [1, 0], sizes = [1, 256], strides = [1, 1]} : vector<4x256xf32> to vector<1x256xf32>
    %16 = vector.broadcast %14 : f32 to vector<1x256xf32>
    %17 = arith.mulf %16, %15 : vector<1x256xf32>
    %18 = arith.addf %13, %17 : vector<1x256xf32>
    %c2 = arith.constant 2 : index
    %19 = memref.load %arg4[%c2] : memref<32xf32, #tpu.memory_space<smem>>
    %20 = vector.extract_strided_slice %9 {offsets = [2, 0], sizes = [1, 256], strides = [1, 1]} : vector<4x256xf32> to vector<1x256xf32>
    %21 = vector.broadcast %19 : f32 to vector<1x256xf32>
    %22 = arith.mulf %21, %20 : vector<1x256xf32>
    %23 = arith.addf %18, %22 : vector<1x256xf32>
    %c3 = arith.constant 3 : index
    %24 = memref.load %arg4[%c3] : memref<32xf32, #tpu.memory_space<smem>>
    %25 = vector.extract_strided_slice %9 {offsets = [3, 0], sizes = [1, 256], strides = [1, 1]} : vector<4x256xf32> to vector<1x256xf32>
    %26 = vector.broadcast %24 : f32 to vector<1x256xf32>
    %27 = arith.mulf %26, %25 : vector<1x256xf32>
    %28 = arith.addf %23, %27 : vector<1x256xf32>
    %c0_7 = arith.constant 0 : index
    %c0_8 = arith.constant 0 : index
    %c0_9 = arith.constant 0 : index
    %29 = vector.load %arg5[%c0_7, %c0_8, %c0_9] : memref<1x8x256xf32, #tpu.memory_space<vmem>>, vector<1x1x256xf32>
    %30 = vector.shape_cast %29 : vector<1x1x256xf32> to vector<1x256xf32>
    %31 = vector.shape_cast %28 : vector<1x256xf32> to vector<1x1x256xf32>
    tpu.vector_store %arg5[%c0_7, %c0_8, %c0_9], %31 {strides = array<i32>} : memref<1x8x256xf32, #tpu.memory_space<vmem>>, vector<1x1x256xf32>,
    %c4 = arith.constant 4 : index
    %32 = memref.load %arg4[%c4] : memref<32xf32, #tpu.memory_space<smem>>
    %33 = vector.extract_strided_slice %9 {offsets = [0, 0], sizes = [1, 256], strides = [1, 1]} : vector<4x256xf32> to vector<1x256xf32>
    %34 = vector.broadcast %32 : f32 to vector<1x256xf32>
    %35 = arith.mulf %34, %33 : vector<1x256xf32>
    %c5 = arith.constant 5 : index
    %36 = memref.load %arg4[%c5] : memref<32xf32, #tpu.memory_space<smem>>
    %37 = vector.extract_strided_slice %9 {offsets = [1, 0], sizes = [1, 256], strides = [1, 1]} : vector<4x256xf32> to vector<1x256xf32>
    %38 = vector.broadcast %36 : f32 to vector<1x256xf32>
    %39 = arith.mulf %38, %37 : vector<1x256xf32>
    %40 = arith.addf %35, %39 : vector<1x256xf32>
    %c6 = arith.constant 6 : index
    %41 = memref.load %arg4[%c6] : memref<32xf32, #tpu.memory_space<smem>>
    %42 = vector.extract_strided_slice %9 {offsets = [2, 0], sizes = [1, 256], strides = [1, 1]} : vector<4x256xf32> to vector<1x256xf32>
    %43 = vector.broadcast %41 : f32 to vector<1x256xf32>
    %44 = arith.mulf %43, %42 : vector<1x256xf32>
    %45 = arith.addf %40, %44 : vector<1x256xf32>
    %c7 = arith.constant 7 : index
    %46 = memref.load %arg4[%c7] : memref<32xf32, #tpu.memory_space<smem>>
    %47 = vector.extract_strided_slice %9 {offsets = [3, 0], sizes = [1, 256], strides = [1, 1]} : vector<4x256xf32> to vector<1x256xf32>
    %48 = vector.broadcast %46 : f32 to vector<1x256xf32>
    %49 = arith.mulf %48, %47 : vector<1x256xf32>
    %50 = arith.addf %45, %49 : vector<1x256xf32>
    %c0_10 = arith.constant 0 : index
    %c1_11 = arith.constant 1 : index
    %c0_12 = arith.constant 0 : index
    %51 = vector.load %arg5[%c0_10, %c1_11, %c0_12] : memref<1x8x256xf32, #tpu.memory_space<vmem>>, vector<1x1x256xf32>
    %52 = vector.shape_cast %51 : vector<1x1x256xf32> to vector<1x256xf32>
    %53 = vector.shape_cast %50 : vector<1x256xf32> to vector<1x1x256xf32>
    tpu.vector_store %arg5[%c0_10, %c1_11, %c0_12], %53 {strides = array<i32>} : memref<1x8x256xf32, #tpu.memory_space<vmem>>, vector<1x1x256xf32>,
    %c8 = arith.constant 8 : index
    %54 = memref.load %arg4[%c8] : memref<32xf32, #tpu.memory_space<smem>>
    %55 = vector.extract_strided_slice %9 {offsets = [0, 0], sizes = [1, 256], strides = [1, 1]} : vector<4x256xf32> to vector<1x256xf32>
    %56 = vector.broadcast %54 : f32 to vector<1x256xf32>
    %57 = arith.mulf %56, %55 : vector<1x256xf32>
    %c9 = arith.constant 9 : index
    %58 = memref.load %arg4[%c9] : memref<32xf32, #tpu.memory_space<smem>>
    %59 = vector.extract_strided_slice %9 {offsets = [1, 0], sizes = [1, 256], strides = [1, 1]} : vector<4x256xf32> to vector<1x256xf32>
    %60 = vector.broadcast %58 : f32 to vector<1x256xf32>
    %61 = arith.mulf %60, %59 : vector<1x256xf32>
    %62 = arith.addf %57, %61 : vector<1x256xf32>
    %c10 = arith.constant 10 : index
    %63 = memref.load %arg4[%c10] : memref<32xf32, #tpu.memory_space<smem>>
    %64 = vector.extract_strided_slice %9 {offsets = [2, 0], sizes = [1, 256], strides = [1, 1]} : vector<4x256xf32> to vector<1x256xf32>
    %65 = vector.broadcast %63 : f32 to vector<1x256xf32>
    %66 = arith.mulf %65, %64 : vector<1x256xf32>
    %67 = arith.addf %62, %66 : vector<1x256xf32>
    %c11 = arith.constant 11 : index
    %68 = memref.load %arg4[%c11] : memref<32xf32, #tpu.memory_space<smem>>
    %69 = vector.extract_strided_slice %9 {offsets = [3, 0], sizes = [1, 256], strides = [1, 1]} : vector<4x256xf32> to vector<1x256xf32>
    %70 = vector.broadcast %68 : f32 to vector<1x256xf32>
    %71 = arith.mulf %70, %69 : vector<1x256xf32>
    %72 = arith.addf %67, %71 : vector<1x256xf32>
    %c0_13 = arith.constant 0 : index
    %c2_14 = arith.constant 2 : index
    %c0_15 = arith.constant 0 : index
    %73 = vector.load %arg5[%c0_13, %c2_14, %c0_15] : memref<1x8x256xf32, #tpu.memory_space<vmem>>, vector<1x1x256xf32>
    %74 = vector.shape_cast %73 : vector<1x1x256xf32> to vector<1x256xf32>
    %75 = vector.shape_cast %72 : vector<1x256xf32> to vector<1x1x256xf32>
    tpu.vector_store %arg5[%c0_13, %c2_14, %c0_15], %75 {strides = array<i32>} : memref<1x8x256xf32, #tpu.memory_space<vmem>>, vector<1x1x256xf32>,
    %c12 = arith.constant 12 : index
    %76 = memref.load %arg4[%c12] : memref<32xf32, #tpu.memory_space<smem>>
    %77 = vector.extract_strided_slice %9 {offsets = [0, 0], sizes = [1, 256], strides = [1, 1]} : vector<4x256xf32> to vector<1x256xf32>
    %78 = vector.broadcast %76 : f32 to vector<1x256xf32>
    %79 = arith.mulf %78, %77 : vector<1x256xf32>
    %c13 = arith.constant 13 : index
    %80 = memref.load %arg4[%c13] : memref<32xf32, #tpu.memory_space<smem>>
    %81 = vector.extract_strided_slice %9 {offsets = [1, 0], sizes = [1, 256], strides = [1, 1]} : vector<4x256xf32> to vector<1x256xf32>
    %82 = vector.broadcast %80 : f32 to vector<1x256xf32>
    %83 = arith.mulf %82, %81 : vector<1x256xf32>
    %84 = arith.addf %79, %83 : vector<1x256xf32>
    %c14 = arith.constant 14 : index
    %85 = memref.load %arg4[%c14] : memref<32xf32, #tpu.memory_space<smem>>
    %86 = vector.extract_strided_slice %9 {offsets = [2, 0], sizes = [1, 256], strides = [1, 1]} : vector<4x256xf32> to vector<1x256xf32>
    %87 = vector.broadcast %85 : f32 to vector<1x256xf32>
    %88 = arith.mulf %87, %86 : vector<1x256xf32>
    %89 = arith.addf %84, %88 : vector<1x256xf32>
    %c15 = arith.constant 15 : index
    %90 = memref.load %arg4[%c15] : memref<32xf32, #tpu.memory_space<smem>>
    %91 = vector.extract_strided_slice %9 {offsets = [3, 0], sizes = [1, 256], strides = [1, 1]} : vector<4x256xf32> to vector<1x256xf32>
    %92 = vector.broadcast %90 : f32 to vector<1x256xf32>
    %93 = arith.mulf %92, %91 : vector<1x256xf32>
    %94 = arith.addf %89, %93 : vector<1x256xf32>
    %c0_16 = arith.constant 0 : index
    %c3_17 = arith.constant 3 : index
    %c0_18 = arith.constant 0 : index
    %95 = vector.load %arg5[%c0_16, %c3_17, %c0_18] : memref<1x8x256xf32, #tpu.memory_space<vmem>>, vector<1x1x256xf32>
    %96 = vector.shape_cast %95 : vector<1x1x256xf32> to vector<1x256xf32>
    %97 = vector.shape_cast %94 : vector<1x256xf32> to vector<1x1x256xf32>
    tpu.vector_store %arg5[%c0_16, %c3_17, %c0_18], %97 {strides = array<i32>} : memref<1x8x256xf32, #tpu.memory_space<vmem>>, vector<1x1x256xf32>,
    %c16 = arith.constant 16 : index
    %98 = memref.load %arg4[%c16] : memref<32xf32, #tpu.memory_space<smem>>
    %99 = vector.extract_strided_slice %9 {offsets = [0, 0], sizes = [1, 256], strides = [1, 1]} : vector<4x256xf32> to vector<1x256xf32>
    %100 = vector.broadcast %98 : f32 to vector<1x256xf32>
    %101 = arith.mulf %100, %99 : vector<1x256xf32>
    %c17 = arith.constant 17 : index
    %102 = memref.load %arg4[%c17] : memref<32xf32, #tpu.memory_space<smem>>
    %103 = vector.extract_strided_slice %9 {offsets = [1, 0], sizes = [1, 256], strides = [1, 1]} : vector<4x256xf32> to vector<1x256xf32>
    %104 = vector.broadcast %102 : f32 to vector<1x256xf32>
    %105 = arith.mulf %104, %103 : vector<1x256xf32>
    %106 = arith.addf %101, %105 : vector<1x256xf32>
    %c18 = arith.constant 18 : index
    %107 = memref.load %arg4[%c18] : memref<32xf32, #tpu.memory_space<smem>>
    %108 = vector.extract_strided_slice %9 {offsets = [2, 0], sizes = [1, 256], strides = [1, 1]} : vector<4x256xf32> to vector<1x256xf32>
    %109 = vector.broadcast %107 : f32 to vector<1x256xf32>
    %110 = arith.mulf %109, %108 : vector<1x256xf32>
    %111 = arith.addf %106, %110 : vector<1x256xf32>
    %c19 = arith.constant 19 : index
    %112 = memref.load %arg4[%c19] : memref<32xf32, #tpu.memory_space<smem>>
    %113 = vector.extract_strided_slice %9 {offsets = [3, 0], sizes = [1, 256], strides = [1, 1]} : vector<4x256xf32> to vector<1x256xf32>
    %114 = vector.broadcast %112 : f32 to vector<1x256xf32>
    %115 = arith.mulf %114, %113 : vector<1x256xf32>
    %116 = arith.addf %111, %115 : vector<1x256xf32>
    %c0_19 = arith.constant 0 : index
    %c4_20 = arith.constant 4 : index
    %c0_21 = arith.constant 0 : index
    %117 = vector.load %arg5[%c0_19, %c4_20, %c0_21] : memref<1x8x256xf32, #tpu.memory_space<vmem>>, vector<1x1x256xf32>
    %118 = vector.shape_cast %117 : vector<1x1x256xf32> to vector<1x256xf32>
    %119 = vector.shape_cast %116 : vector<1x256xf32> to vector<1x1x256xf32>
    tpu.vector_store %arg5[%c0_19, %c4_20, %c0_21], %119 {strides = array<i32>} : memref<1x8x256xf32, #tpu.memory_space<vmem>>, vector<1x1x256xf32>,
    %c20 = arith.constant 20 : index
    %120 = memref.load %arg4[%c20] : memref<32xf32, #tpu.memory_space<smem>>
    %121 = vector.extract_strided_slice %9 {offsets = [0, 0], sizes = [1, 256], strides = [1, 1]} : vector<4x256xf32> to vector<1x256xf32>
    %122 = vector.broadcast %120 : f32 to vector<1x256xf32>
    %123 = arith.mulf %122, %121 : vector<1x256xf32>
    %c21 = arith.constant 21 : index
    %124 = memref.load %arg4[%c21] : memref<32xf32, #tpu.memory_space<smem>>
    %125 = vector.extract_strided_slice %9 {offsets = [1, 0], sizes = [1, 256], strides = [1, 1]} : vector<4x256xf32> to vector<1x256xf32>
    %126 = vector.broadcast %124 : f32 to vector<1x256xf32>
    %127 = arith.mulf %126, %125 : vector<1x256xf32>
    %128 = arith.addf %123, %127 : vector<1x256xf32>
    %c22 = arith.constant 22 : index
    %129 = memref.load %arg4[%c22] : memref<32xf32, #tpu.memory_space<smem>>
    %130 = vector.extract_strided_slice %9 {offsets = [2, 0], sizes = [1, 256], strides = [1, 1]} : vector<4x256xf32> to vector<1x256xf32>
    %131 = vector.broadcast %129 : f32 to vector<1x256xf32>
    %132 = arith.mulf %131, %130 : vector<1x256xf32>
    %133 = arith.addf %128, %132 : vector<1x256xf32>
    %c23 = arith.constant 23 : index
    %134 = memref.load %arg4[%c23] : memref<32xf32, #tpu.memory_space<smem>>
    %135 = vector.extract_strided_slice %9 {offsets = [3, 0], sizes = [1, 256], strides = [1, 1]} : vector<4x256xf32> to vector<1x256xf32>
    %136 = vector.broadcast %134 : f32 to vector<1x256xf32>
    %137 = arith.mulf %136, %135 : vector<1x256xf32>
    %138 = arith.addf %133, %137 : vector<1x256xf32>
    %c0_22 = arith.constant 0 : index
    %c5_23 = arith.constant 5 : index
    %c0_24 = arith.constant 0 : index
    %139 = vector.load %arg5[%c0_22, %c5_23, %c0_24] : memref<1x8x256xf32, #tpu.memory_space<vmem>>, vector<1x1x256xf32>
    %140 = vector.shape_cast %139 : vector<1x1x256xf32> to vector<1x256xf32>
    %141 = vector.shape_cast %138 : vector<1x256xf32> to vector<1x1x256xf32>
    tpu.vector_store %arg5[%c0_22, %c5_23, %c0_24], %141 {strides = array<i32>} : memref<1x8x256xf32, #tpu.memory_space<vmem>>, vector<1x1x256xf32>,
    %c24 = arith.constant 24 : index
    %142 = memref.load %arg4[%c24] : memref<32xf32, #tpu.memory_space<smem>>
    %143 = vector.extract_strided_slice %9 {offsets = [0, 0], sizes = [1, 256], strides = [1, 1]} : vector<4x256xf32> to vector<1x256xf32>
    %144 = vector.broadcast %142 : f32 to vector<1x256xf32>
    %145 = arith.mulf %144, %143 : vector<1x256xf32>
    %c25 = arith.constant 25 : index
    %146 = memref.load %arg4[%c25] : memref<32xf32, #tpu.memory_space<smem>>
    %147 = vector.extract_strided_slice %9 {offsets = [1, 0], sizes = [1, 256], strides = [1, 1]} : vector<4x256xf32> to vector<1x256xf32>
    %148 = vector.broadcast %146 : f32 to vector<1x256xf32>
    %149 = arith.mulf %148, %147 : vector<1x256xf32>
    %150 = arith.addf %145, %149 : vector<1x256xf32>
    %c26 = arith.constant 26 : index
    %151 = memref.load %arg4[%c26] : memref<32xf32, #tpu.memory_space<smem>>
    %152 = vector.extract_strided_slice %9 {offsets = [2, 0], sizes = [1, 256], strides = [1, 1]} : vector<4x256xf32> to vector<1x256xf32>
    %153 = vector.broadcast %151 : f32 to vector<1x256xf32>
    %154 = arith.mulf %153, %152 : vector<1x256xf32>
    %155 = arith.addf %150, %154 : vector<1x256xf32>
    %c27 = arith.constant 27 : index
    %156 = memref.load %arg4[%c27] : memref<32xf32, #tpu.memory_space<smem>>
    %157 = vector.extract_strided_slice %9 {offsets = [3, 0], sizes = [1, 256], strides = [1, 1]} : vector<4x256xf32> to vector<1x256xf32>
    %158 = vector.broadcast %156 : f32 to vector<1x256xf32>
    %159 = arith.mulf %158, %157 : vector<1x256xf32>
    %160 = arith.addf %155, %159 : vector<1x256xf32>
    %c0_25 = arith.constant 0 : index
    %c6_26 = arith.constant 6 : index
    %c0_27 = arith.constant 0 : index
    %161 = vector.load %arg5[%c0_25, %c6_26, %c0_27] : memref<1x8x256xf32, #tpu.memory_space<vmem>>, vector<1x1x256xf32>
    %162 = vector.shape_cast %161 : vector<1x1x256xf32> to vector<1x256xf32>
    %163 = vector.shape_cast %160 : vector<1x256xf32> to vector<1x1x256xf32>
    tpu.vector_store %arg5[%c0_25, %c6_26, %c0_27], %163 {strides = array<i32>} : memref<1x8x256xf32, #tpu.memory_space<vmem>>, vector<1x1x256xf32>,
    %c28 = arith.constant 28 : index
    %164 = memref.load %arg4[%c28] : memref<32xf32, #tpu.memory_space<smem>>
    %165 = vector.extract_strided_slice %9 {offsets = [0, 0], sizes = [1, 256], strides = [1, 1]} : vector<4x256xf32> to vector<1x256xf32>
    %166 = vector.broadcast %164 : f32 to vector<1x256xf32>
    %167 = arith.mulf %166, %165 : vector<1x256xf32>
    %c29 = arith.constant 29 : index
    %168 = memref.load %arg4[%c29] : memref<32xf32, #tpu.memory_space<smem>>
    %169 = vector.extract_strided_slice %9 {offsets = [1, 0], sizes = [1, 256], strides = [1, 1]} : vector<4x256xf32> to vector<1x256xf32>
    %170 = vector.broadcast %168 : f32 to vector<1x256xf32>
    %171 = arith.mulf %170, %169 : vector<1x256xf32>
    %172 = arith.addf %167, %171 : vector<1x256xf32>
    %c30 = arith.constant 30 : index
    %173 = memref.load %arg4[%c30] : memref<32xf32, #tpu.memory_space<smem>>
    %174 = vector.extract_strided_slice %9 {offsets = [2, 0], sizes = [1, 256], strides = [1, 1]} : vector<4x256xf32> to vector<1x256xf32>
    %175 = vector.broadcast %173 : f32 to vector<1x256xf32>
    %176 = arith.mulf %175, %174 : vector<1x256xf32>
    %177 = arith.addf %172, %176 : vector<1x256xf32>
    %c31 = arith.constant 31 : index
    %178 = memref.load %arg4[%c31] : memref<32xf32, #tpu.memory_space<smem>>
    %179 = vector.extract_strided_slice %9 {offsets = [3, 0], sizes = [1, 256], strides = [1, 1]} : vector<4x256xf32> to vector<1x256xf32>
    %180 = vector.broadcast %178 : f32 to vector<1x256xf32>
    %181 = arith.mulf %180, %179 : vector<1x256xf32>
    %182 = arith.addf %177, %181 : vector<1x256xf32>
    %c0_28 = arith.constant 0 : index
    %c7_29 = arith.constant 7 : index
    %c0_30 = arith.constant 0 : index
    %183 = vector.load %arg5[%c0_28, %c7_29, %c0_30] : memref<1x8x256xf32, #tpu.memory_space<vmem>>, vector<1x1x256xf32>
    %184 = vector.shape_cast %183 : vector<1x1x256xf32> to vector<1x256xf32>
    %185 = vector.shape_cast %182 : vector<1x256xf32> to vector<1x1x256xf32>
    tpu.vector_store %arg5[%c0_28, %c7_29, %c0_30], %185 {strides = array<i32>} : memref<1x8x256xf32, #tpu.memory_space<vmem>>, vector<1x1x256xf32>,
    return
  }
  func.func @transform_0(%arg0: i32, %arg1: i32) -> (i32, i32, i32) {
    %c0_i32 = arith.constant 0 : i32
    %c0_i32_0 = arith.constant 0 : i32
    return %arg0, %c0_i32, %arg1 : i32, i32, i32
  }
  func.func @transform_1(%arg0: i32, %arg1: i32) -> (i32, i32) {
    %c0_i32 = arith.constant 0 : i32
    %c0_i32_0 = arith.constant 0 : i32
    %c0_i32_1 = arith.constant 0 : i32
    return %c0_i32, %c0_i32_0 : i32, i32
  }
  func.func @transform_2(%arg0: i32, %arg1: i32) -> i32 {
    %c0_i32 = arith.constant 0 : i32
    %c0_i32_0 = arith.constant 0 : i32
    return %c0_i32 : i32
  }
  func.func @transform_3(%arg0: i32, %arg1: i32) -> (i32, i32, i32) {
    %c0_i32 = arith.constant 0 : i32
    %c0_i32_0 = arith.constant 0 : i32
    return %arg0, %c0_i32, %arg1 : i32, i32, i32
  }
}

</mosaic_0001>

<llo_original>
// kernel: transition_forward.1
$region0: #{transition_forward.1}
  #allocation0 [shape = 'u32[]', space=smem, size = 0x4, offset = 0x4, fixed_abs, tag = 'smem constant byte address 0x4 - core index']
  #allocation1 [shape = 'u32[144,128]{1,0:T(1,128)}', space=vmem, size = 0x12000, scoped, tag = 'internal scratch']
  %s0 = inlined_call_operand.vmem [shape: f32[2,4,256], index: 0, kind: input, shape index: {}]
  %s1 = inlined_call_operand.vmem [shape: f32[4,2], index: 1, kind: input, shape index: {}]
  %s2 = inlined_call_operand.vmem [shape: f32[32], index: 2, kind: input, shape index: {}]
  %s3 = inlined_call_operand.vmem [shape: f32[2,8,256], index: 3, kind: output, shape index: {}]
  %s4 = sld [smem:[#allocation0]]
  $region49: #{transition_forward.1} parent=0
    _
  %s6 = ssub.s32 1, %s4
  %s7 = scalar_select 0, %s6, %s4
  $region1: #{transition_forward.1} parent=0
    #allocation2 [shape = 'u8[512]{0}', space=smem, size = 0x200, scoped, tag = 'input window, operand 2, single buffered']
    #allocation3 [shape = 's32[2]{0}', space=sflag, size = 0x8, scoped, tag = 'scoped memory for transition_forward.1']
    %8 = vsyncpa [#allocation3], 0
    loop: start=0, step=1, limit=4
    $region2: #{transition_forward.1} parent=1 // loop_pre_header
      _
    $region3: #{transition_forward.1} parent=1 // loop_header
      %s10 = sphi 0, %s14
      %p11 = scmp.ge.s32.totalorder %s10, 4
      %s17 = sphi 0, %s29
      %s18 = sphi 0, %s25
      %s19 = sphi 0, %s17
      %s20 = sphi 0, %s18
      %s21 = sphi 0, %s19
      %s22 = sphi 0, %s20
      %s34 = sphi 0, %s36
      %s37 = sphi 0, %s34
      %s38 = sphi 0, %s37
      %s54 = sphi 0, %s38
      %s58 = sphi 0, %s58
      %s60 = sphi 0, %s58
      %s61 = sphi 0, %s60
      %s75 = sphi 0, %s61
      %s79 = sphi 0, %s79
      %s81 = sphi 0, %s79
      %s82 = sphi 0, %s81
      %s96 = sphi 0, %s82
      %s104 = sphi 0, %s106
      %s107 = sphi 0, %s104
      %s108 = sphi 0, %s107
      %s124 = sphi 0, %s108
    $region4: #{transition_forward.1} parent=1 // loop_header_branch
      %13 = sbr.rel (%p11) target = $region8
    $region5: #{transition_forward.1} parent=1 // loop_body
      %s15 = ssub.s32 %s10, 1
      %s16 = ssub.s32 %s10, 2
      %s23 = sadd.s32 1, %s18
      %p24 = scmp.ge.s32.totalorder %s23, 1
      %s25 = scalar_select %p24, 0, %s23
      %s26 = sadd.s32 1, %s17
      %s27 = scalar_select %p24, %s26, %s17
      %p28 = scmp.ge.s32.totalorder %s27, 2
      %s29 = scalar_select %p28, 0, %s27
      %s30 = ssub.s32 %s17, %s29
      %s31 = ssub.s32 %s18, %s25
      %s32 = sor.u32 %s30, %s31
      %p33 = scmp.eq.s32.totalorder %s32, 0
      %s35 = sadd.s32 %s34, 1
      %s36 = scalar_select %p33, %s34, %s35
      %p39 = pneg %p33
      %p40 = scmp.eq.s32.totalorder %s10, 1
      %p41 = por %p39, %p40
      %p42 = scmp.ne.s32.totalorder %s34, %s37
      %p43 = scmp.eq.s32.totalorder %s10, 0
      %p44 = por %p42, %p43
      %p45 = scmp.ne.s32.totalorder %s34, %s37
      %p46 = scmp.eq.s32.totalorder %s15, 1
      %p47 = por %p45, %p46
      %p48 = scmp.ne.s32.totalorder %s37, %s38
      %p49 = scmp.eq.s32.totalorder %s15, 0
      %p50 = por %p48, %p49
      %p51 = scmp.ne.s32.totalorder %s37, %s38
      %p52 = scmp.eq.s32.totalorder %s16, 1
      %p53 = por %p51, %p52
      %p55 = scmp.ne.s32.totalorder %s38, %s54
      %p56 = scmp.eq.s32.totalorder %s16, 0
      %p57 = por %p55, %p56
      %s59 = sadd.s32 %s58, 1
      %p62 = scmp.eq.s32.totalorder %s10, 1
      %p63 = scmp.ne.s32.totalorder %s58, %s60
      %p64 = scmp.eq.s32.totalorder %s10, 0
      %p65 = por %p63, %p64
      %p66 = scmp.ne.s32.totalorder %s58, %s60
      %p67 = scmp.eq.s32.totalorder %s15, 1
      %p68 = por %p66, %p67
      %p69 = scmp.ne.s32.totalorder %s60, %s61
      %p70 = scmp.eq.s32.totalorder %s15, 0
      %p71 = por %p69, %p70
      %p72 = scmp.ne.s32.totalorder %s60, %s61
      %p73 = scmp.eq.s32.totalorder %s16, 1
      %p74 = por %p72, %p73
      %p76 = scmp.ne.s32.totalorder %s61, %s75
      %p77 = scmp.eq.s32.totalorder %s16, 0
      %p78 = por %p76, %p77
      %s80 = sadd.s32 %s79, 1
      %p83 = scmp.eq.s32.totalorder %s10, 1
      %p84 = scmp.ne.s32.totalorder %s79, %s81
      %p85 = scmp.eq.s32.totalorder %s10, 0
      %p86 = por %p84, %p85
      %p87 = scmp.ne.s32.totalorder %s79, %s81
      %p88 = scmp.eq.s32.totalorder %s15, 1
      %p89 = por %p87, %p88
      %p90 = scmp.ne.s32.totalorder %s81, %s82
      %p91 = scmp.eq.s32.totalorder %s15, 0
      %p92 = por %p90, %p91
      %p93 = scmp.ne.s32.totalorder %s81, %s82
      %p94 = scmp.eq.s32.totalorder %s16, 1
      %p95 = por %p93, %p94
      %p97 = scmp.ne.s32.totalorder %s82, %s96
      %p98 = scmp.eq.s32.totalorder %s16, 0
      %p99 = por %p97, %p98
      %s100 = ssub.s32 %s17, %s29
      %s101 = ssub.s32 %s18, %s25
      %s102 = sor.u32 %s100, %s101
      %p103 = scmp.eq.s32.totalorder %s102, 0
      %s105 = sadd.s32 %s104, 1
      %s106 = scalar_select %p103, %s104, %s105
      %p109 = pneg %p103
      %p110 = scmp.eq.s32.totalorder %s10, 1
      %p111 = por %p109, %p110
      %p112 = scmp.ne.s32.totalorder %s104, %s107
      %p113 = scmp.eq.s32.totalorder %s10, 0
      %p114 = por %p112, %p113
      %p115 = scmp.ne.s32.totalorder %s104, %s107
      %p116 = scmp.eq.s32.totalorder %s15, 1
      %p117 = por %p115, %p116
      %p118 = scmp.ne.s32.totalorder %s107, %s108
      %p119 = scmp.eq.s32.totalorder %s15, 0
      %p120 = por %p118, %p119
      %p121 = scmp.ne.s32.totalorder %s107, %s108
      %p122 = scmp.eq.s32.totalorder %s16, 1
      %p123 = por %p121, %p122
      %p125 = scmp.ne.s32.totalorder %s108, %s124
      %p126 = scmp.eq.s32.totalorder %s16, 0
      %p127 = por %p125, %p126
      %p128 = scmp.le.s32.totalorder 1, %s10
      %p129 = scmp.lt.s32.totalorder %s10, 3
      %p130 = pnand %p128, %p129
      %p131 = pneg %p130
      // Predicated region
      $region9: #{transition_forward.1} parent=5 // pred_check
        _
      $region10: #{transition_forward.1} parent=5 // pred_check_branch
        %133 = sbr.rel (%p130) target = $region12
      $region11: #{transition_forward.1} parent=5 // pred_region
        %s134 = ssub.s32 %s10, 1
        // Predicated region
        $region13: #{transition_forward.1} parent=11 // pred_check
          %p135 = pneg %p71
        $region14: #{transition_forward.1} parent=11 // pred_check_branch
          %137 = sbr.rel (%p135) target = $region16
        $region15: #{transition_forward.1} parent=11 // pred_region
          _
        $region16: #{transition_forward.1} parent=11 // pred_fallthru
          _
        // Predicated region
        $region17: #{transition_forward.1} parent=11 // pred_check
          %p138 = pneg %p92
        $region18: #{transition_forward.1} parent=11 // pred_check_branch
          %140 = sbr.rel (%p138) target = $region20
        $region19: #{transition_forward.1} parent=11 // pred_region
          %s142 = ssub.s32 16, 16
          %143 = vsyncadd [#allocation3], %s142
          %s145 = sshll.u32 %s2, 4
          %s146 = int_to_ptr.vmem [resolvable:$true] %s145
          %148 = dma.vmem_to_smem %s146, 16, [#allocation2], [#allocation3]
        $region20: #{transition_forward.1} parent=11 // pred_fallthru
          _
      $region12: #{transition_forward.1} parent=5 // pred_fallthru
        _
      %p149 = scmp.lt.s32.totalorder %s10, 2
      // Predicated region
      $region21: #{transition_forward.1} parent=5 // pred_check
        %p150 = pneg %p149
      $region22: #{transition_forward.1} parent=5 // pred_check_branch
        %152 = sbr.rel (%p150) target = $region24
      $region23: #{transition_forward.1} parent=5 // pred_region
        // Predicated region
        $region25: #{transition_forward.1} parent=23 // pred_check
          %p153 = pneg %p44
        $region26: #{transition_forward.1} parent=23 // pred_check_branch
          %155 = sbr.rel (%p153) target = $region28
        $region27: #{transition_forward.1} parent=23 // pred_region
          %s156 = smul.u32 2, %s18
          %p157 = scmp.lt.s32.totalorder %s17, 1
          %s158 = scalar_select %p157, %s17, 1
          %p159 = scmp.lt.s32.totalorder %s156, 1
          %s160 = scalar_select %p159, %s156, 1
          %s161 = smul.addr %s158, 2
          %s162 = sadd.s32 %s160, %s161
          %s163 = smul.addr %s162, 4
          %s164 = scalar_lea.vmem %s0, %s163
          %s165 = smul.u32 2, %s18
        $region28: #{transition_forward.1} parent=23 // pred_fallthru
          _
      $region24: #{transition_forward.1} parent=5 // pred_fallthru
        _
      %p166 = scmp.le.s32.totalorder 1, %s10
      %p167 = scmp.lt.s32.totalorder %s10, 3
      %p168 = pnand %p166, %p167
      %p169 = pneg %p168
      // Predicated region
      $region29: #{transition_forward.1} parent=5 // pred_check
        _
      $region30: #{transition_forward.1} parent=5 // pred_check_branch
        %171 = sbr.rel (%p168) target = $region32
      $region31: #{transition_forward.1} parent=5 // pred_region
        %s172 = ssub.s32 %s10, 1
        // Predicated region
        $region33: #{transition_forward.1} parent=31 // pred_check
          %p173 = pneg %p92
        $region34: #{transition_forward.1} parent=31 // pred_check_branch
          %175 = sbr.rel (%p173) target = $region36
        $region35: #{transition_forward.1} parent=31 // pred_region
          %176 = dma.done [#allocation3], 16
        $region36: #{transition_forward.1} parent=31 // pred_fallthru
          _
        %177 = sfence
        %s178 = smul.u32 2, %s20
        %p179 = scmp.lt.s32.totalorder %s19, 1
        %s180 = scalar_select %p179, %s19, 1
        %p181 = scmp.lt.s32.totalorder %s178, 1
        %s182 = scalar_select %p181, %s178, 1
        %s183 = smul.addr %s180, 2
        %s184 = sadd.s32 %s182, %s183
        %s185 = smul.addr %s184, 4
        %s186 = scalar_lea.vmem %s0, %s185
        %p187 = pneg %p50
        %p188 = pneg %p47
        %p189 = pneg %p71
        %p190 = pneg %p68
        %p191 = pneg %p92
        %p192 = pneg %p89
        %p193 = pneg %p120
        %p194 = pneg %p117
        %s195 = smul.u32 2, %s20
        %p196 = scmp.lt.s32.totalorder %s19, 1
        %s197 = scalar_select %p196, %s19, 1
        %p198 = scmp.lt.s32.totalorder %s195, 1
        %s199 = scalar_select %p198, %s195, 1
        %s200 = smul.addr %s197, 2
        %s201 = sadd.s32 %s199, %s200
        %s202 = smul.addr %s201, 8
        %s203 = scalar_lea.vmem %s3, %s202
        %s204 = smul.u32 2, %s20
        %p205 = scmp.lt.s32.totalorder %s19, 1
        %s206 = scalar_select %p205, %s19, 1
        %p207 = scmp.lt.s32.totalorder %s204, 1
        %s208 = scalar_select %p207, %s204, 1
        %s209 = smul.addr %s206, 2
        %s210 = sadd.s32 %s208, %s209
        %s211 = smul.addr %s210, 4
        %s212 = scalar_lea.vmem %s0, %s211
        %s213 = smul.u32 2, %s20
        %s214 = smul.u32 2, %s20
        %p215 = scmp.lt.s32.totalorder %s19, 1
        %s216 = scalar_select %p215, %s19, 1
        %p217 = scmp.lt.s32.totalorder %s214, 1
        %s218 = scalar_select %p217, %s214, 1
        %s219 = smul.addr %s216, 2
        %s220 = sadd.s32 %s218, %s219
        %s221 = smul.addr %s220, 8
        %s222 = scalar_lea.vmem %s3, %s221
        %s223 = smul.u32 2, %s20
        %v224 = vld [vmem:[%s212] sm:$0xff]
        %v225 = vld [vmem:[%s1] sm:$0xf]
        %227 = vset.pattern.permute.xlu0 0
        %228 = vperm.xlu0 %227, %v225
        %v229 = vpop.permute.xlu0 %228
        %v231 = vunpack.c.l.s4 839922192
        %v232 = vunpack.c.0.s8 %v231
        %v233 = vlaneseq
        %v234 = vshrl.u32 %v233, 7
        %v235 = vsub.s32 %v232, %v234
        %v236 = vrot.slane %v229, %v235
        %v238 = vmul.f32 %v224, %v236
        %239 = vset.pattern.permute.xlu0 1
        %240 = vperm.xlu0 %239, %v225
        %v241 = vpop.permute.xlu0 %240
        %v243 = vunpack.c.l.s4 839922192
        %v244 = vunpack.c.0.s8 %v243
        %v245 = vlaneseq
        %v246 = vshrl.u32 %v245, 7
        %v247 = vsub.s32 %v244, %v246
        %v248 = vrot.slane %v241, %v247
        %v250 = vadd.f32 %v238, %v248
        %v251 = vmax.f32 %v250, 0.0
        %s252 = sld [smem:[#allocation2]]
        %v253 = vstv %s252
        %v254 = vmul.f32 %v253, %v251
        %s255 = sld [smem:[#allocation2 + $0x1]]
        %v256 = vstv %s255
        %v257 = vmul.f32 %v256, %v251
        %v259 = vrot.slane %v257, 5
        %v260 = vrot.slane %v259, 4
        %v262 = vadd.f32 %v254, %v260
        %s263 = sld [smem:[#allocation2 + $0x2]]
        %v264 = vstv %s263
        %v265 = vmul.f32 %v264, %v251
        %v267 = vrot.slane %v265, 6
        %v268 = vrot.slane %v267, 4
        %v270 = vadd.f32 %v262, %v268
        %s271 = sld [smem:[#allocation2 + $0x3]]
        %v272 = vstv %s271
        %v273 = vmul.f32 %v272, %v251
        %v275 = vrot.slane %v273, 7
        %v276 = vrot.slane %v275, 4
        %v278 = vadd.f32 %v270, %v276
        %v281 = vunpack.c.l.s4 1966171168
        %v282 = vunpack.c.0.s8 %v281
        %v283 = vlaneseq
        %v284 = vshrl.u32 %v283, 7
        %v285 = vsub.s32 %v282, %v284
        %v286 = vrot.slane %v278, %v285
        %v288 = vunpack.c.l.s4 1966171168
        %v289 = vunpack.c.0.s8 %v288
        %v290 = vlaneseq
        %v291 = vshrl.u32 %v290, 7
        %v292 = vsub.s32 %v289, %v291
        %v293 = vrot.slane %v286, %v292
        %v295 = vlaneseq
        %vm296 = vcmp.ge.s32.totalorder %v295, 0
        %vm297 = vcmp.lt.s32.totalorder %v295, 256
        %vm298 = vmand %vm296, %vm297
        %299 = vst.msk [vmem:[%s222] ss:$8 sm:$0x3] %vm298, %v293
        %300 = vst.msk [vmem:[%s222] ss:$8 sm:$0x0] %vm298, %v293
        %s301 = sld [smem:[#allocation2 + $0x4]]
        %v302 = vstv %s301
        %v303 = vmul.f32 %v302, %v251
        %s304 = sld [smem:[#allocation2 + $0x5]]
        %v305 = vstv %s304
        %v306 = vmul.f32 %v305, %v251
        %v308 = vrot.slane %v306, 5
        %v309 = vrot.slane %v308, 4
        %v311 = vadd.f32 %v303, %v309
        %s312 = sld [smem:[#allocation2 + $0x6]]
        %v313 = vstv %s312
        %v314 = vmul.f32 %v313, %v251
        %v316 = vrot.slane %v314, 6
        %v317 = vrot.slane %v316, 4
        %v319 = vadd.f32 %v311, %v317
        %s320 = sld [smem:[#allocation2 + $0x7]]
        %v321 = vstv %s320
        %v322 = vmul.f32 %v321, %v251
        %v324 = vrot.slane %v322, 7
        %v325 = vrot.slane %v324, 4
        %v327 = vadd.f32 %v319, %v325
        %v330 = vunpack.c.l.s4 1966171168
        %v331 = vunpack.c.0.s8 %v330
        %v332 = vlaneseq
        %v333 = vshrl.u32 %v332, 7
        %v334 = vsub.s32 %v331, %v333
        %v335 = vrot.slane %v327, %v334
        %v337 = vunpack.c.l.s4 1966171168
        %v338 = vunpack.c.0.s8 %v337
        %v339 = vlaneseq
        %v340 = vshrl.u32 %v339, 7
        %v341 = vsub.s32 %v338, %v340
        %v342 = vrot.slane %v335, %v341
        %s344 = scalar_lea.vmem %s222, 1
        %345 = vst.msk [vmem:[%s344] ss:$8 sm:$0x3] %vm298, %v342
        %346 = vst.msk [vmem:[%s344] ss:$8 sm:$0x0] %vm298, %v342
        %s347 = sld [smem:[#allocation2 + $0x8]]
        %v348 = vstv %s347
        %v349 = vmul.f32 %v348, %v251
        %s350 = sld [smem:[#allocation2 + $0x9]]
        %v351 = vstv %s350
        %v352 = vmul.f32 %v351, %v251
        %v354 = vrot.slane %v352, 5
        %v355 = vrot.slane %v354, 4
        %v357 = vadd.f32 %v349, %v355
        %s358 = sld [smem:[#allocation2 + $0xa]]
        %v359 = vstv %s358
        %v360 = vmul.f32 %v359, %v251
        %v362 = vrot.slane %v360, 6
        %v363 = vrot.slane %v362, 4
        %v365 = vadd.f32 %v357, %v363
        %s366 = sld [smem:[#allocation2 + $0xb]]
        %v367 = vstv %s366
        %v368 = vmul.f32 %v367, %v251
        %v370 = vrot.slane %v368, 7
        %v371 = vrot.slane %v370, 4
        %v373 = vadd.f32 %v365, %v371
        %v376 = vunpack.c.l.s4 1966171168
        %v377 = vunpack.c.0.s8 %v376
        %v378 = vlaneseq
        %v379 = vshrl.u32 %v378, 7
        %v380 = vsub.s32 %v377, %v379
        %v381 = vrot.slane %v373, %v380
        %v383 = vunpack.c.l.s4 1966171168
        %v384 = vunpack.c.0.s8 %v383
        %v385 = vlaneseq
        %v386 = vshrl.u32 %v385, 7
        %v387 = vsub.s32 %v384, %v386
        %v388 = vrot.slane %v381, %v387
        %s390 = scalar_lea.vmem %s222, 2
        %391 = vst.msk [vmem:[%s390] ss:$8 sm:$0x3] %vm298, %v388
        %392 = vst.msk [vmem:[%s390] ss:$8 sm:$0x0] %vm298, %v388
        %s393 = sld [smem:[#allocation2 + $0xc]]
        %v394 = vstv %s393
        %v395 = vmul.f32 %v394, %v251
        %s396 = sld [smem:[#allocation2 + $0xd]]
        %v397 = vstv %s396
        %v398 = vmul.f32 %v397, %v251
        %v400 = vrot.slane %v398, 5
        %v401 = vrot.slane %v400, 4
        %v403 = vadd.f32 %v395, %v401
        %s404 = sld [smem:[#allocation2 + $0xe]]
        %v405 = vstv %s404
        %v406 = vmul.f32 %v405, %v251
        %v408 = vrot.slane %v406, 6
        %v409 = vrot.slane %v408, 4
        %v411 = vadd.f32 %v403, %v409
        %s412 = sld [smem:[#allocation2 + $0xf]]
        %v413 = vstv %s412
        %v414 = vmul.f32 %v413, %v251
        %v416 = vrot.slane %v414, 7
        %v417 = vrot.slane %v416, 4
        %v419 = vadd.f32 %v411, %v417
        %v422 = vunpack.c.l.s4 1966171168
        %v423 = vunpack.c.0.s8 %v422
        %v424 = vlaneseq
        %v425 = vshrl.u32 %v424, 7
        %v426 = vsub.s32 %v423, %v425
        %v427 = vrot.slane %v419, %v426
        %v429 = vunpack.c.l.s4 1966171168
        %v430 = vunpack.c.0.s8 %v429
        %v431 = vlaneseq
        %v432 = vshrl.u32 %v431, 7
        %v433 = vsub.s32 %v430, %v432
        %v434 = vrot.slane %v427, %v433
        %s436 = scalar_lea.vmem %s222, 3
        %437 = vst.msk [vmem:[%s436] ss:$8 sm:$0x3] %vm298, %v434
        %438 = vst.msk [vmem:[%s436] ss:$8 sm:$0x0] %vm298, %v434
        %s439 = sld [smem:[#allocation2 + $0x10]]
        %v440 = vstv %s439
        %v441 = vmul.f32 %v440, %v251
        %s442 = sld [smem:[#allocation2 + $0x11]]
        %v443 = vstv %s442
        %v444 = vmul.f32 %v443, %v251
        %v446 = vrot.slane %v444, 5
        %v447 = vrot.slane %v446, 4
        %v449 = vadd.f32 %v441, %v447
        %s450 = sld [smem:[#allocation2 + $0x12]]
        %v451 = vstv %s450
        %v452 = vmul.f32 %v451, %v251
        %v454 = vrot.slane %v452, 6
        %v455 = vrot.slane %v454, 4
        %v457 = vadd.f32 %v449, %v455
        %s458 = sld [smem:[#allocation2 + $0x13]]
        %v459 = vstv %s458
        %v460 = vmul.f32 %v459, %v251
        %v462 = vrot.slane %v460, 7
        %v463 = vrot.slane %v462, 4
        %v465 = vadd.f32 %v457, %v463
        %v468 = vunpack.c.l.s4 1966171168
        %v469 = vunpack.c.0.s8 %v468
        %v470 = vlaneseq
        %v471 = vshrl.u32 %v470, 7
        %v472 = vsub.s32 %v469, %v471
        %v473 = vrot.slane %v465, %v472
        %v475 = vunpack.c.l.s4 1966171168
        %v476 = vunpack.c.0.s8 %v475
        %v477 = vlaneseq
        %v478 = vshrl.u32 %v477, 7
        %v479 = vsub.s32 %v476, %v478
        %v480 = vrot.slane %v473, %v479
        %s482 = scalar_lea.vmem %s222, 4
        %483 = vst.msk [vmem:[%s482] ss:$8 sm:$0x3] %vm298, %v480
        %484 = vst.msk [vmem:[%s482] ss:$8 sm:$0x0] %vm298, %v480
        %s485 = sld [smem:[#allocation2 + $0x14]]
        %v486 = vstv %s485
        %v487 = vmul.f32 %v486, %v251
        %s488 = sld [smem:[#allocation2 + $0x15]]
        %v489 = vstv %s488
        %v490 = vmul.f32 %v489, %v251
        %v492 = vrot.slane %v490, 5
        %v493 = vrot.slane %v492, 4
        %v495 = vadd.f32 %v487, %v493
        %s496 = sld [smem:[#allocation2 + $0x16]]
        %v497 = vstv %s496
        %v498 = vmul.f32 %v497, %v251
        %v500 = vrot.slane %v498, 6
        %v501 = vrot.slane %v500, 4
        %v503 = vadd.f32 %v495, %v501
        %s504 = sld [smem:[#allocation2 + $0x17]]
        %v505 = vstv %s504
        %v506 = vmul.f32 %v505, %v251
        %v508 = vrot.slane %v506, 7
        %v509 = vrot.slane %v508, 4
        %v511 = vadd.f32 %v503, %v509
        %v514 = vunpack.c.l.s4 1966171168
        %v515 = vunpack.c.0.s8 %v514
        %v516 = vlaneseq
        %v517 = vshrl.u32 %v516, 7
        %v518 = vsub.s32 %v515, %v517
        %v519 = vrot.slane %v511, %v518
        %v521 = vunpack.c.l.s4 1966171168
        %v522 = vunpack.c.0.s8 %v521
        %v523 = vlaneseq
        %v524 = vshrl.u32 %v523, 7
        %v525 = vsub.s32 %v522, %v524
        %v526 = vrot.slane %v519, %v525
        %s528 = scalar_lea.vmem %s222, 5
        %529 = vst.msk [vmem:[%s528] ss:$8 sm:$0x3] %vm298, %v526
        %530 = vst.msk [vmem:[%s528] ss:$8 sm:$0x0] %vm298, %v526
        %s531 = sld [smem:[#allocation2 + $0x18]]
        %v532 = vstv %s531
        %v533 = vmul.f32 %v532, %v251
        %s534 = sld [smem:[#allocation2 + $0x19]]
        %v535 = vstv %s534
        %v536 = vmul.f32 %v535, %v251
        %v538 = vrot.slane %v536, 5
        %v539 = vrot.slane %v538, 4
        %v541 = vadd.f32 %v533, %v539
        %s542 = sld [smem:[#allocation2 + $0x1a]]
        %v543 = vstv %s542
        %v544 = vmul.f32 %v543, %v251
        %v546 = vrot.slane %v544, 6
        %v547 = vrot.slane %v546, 4
        %v549 = vadd.f32 %v541, %v547
        %s550 = sld [smem:[#allocation2 + $0x1b]]
        %v551 = vstv %s550
        %v552 = vmul.f32 %v551, %v251
        %v554 = vrot.slane %v552, 7
        %v555 = vrot.slane %v554, 4
        %v557 = vadd.f32 %v549, %v555
        %v560 = vunpack.c.l.s4 1966171168
        %v561 = vunpack.c.0.s8 %v560
        %v562 = vlaneseq
        %v563 = vshrl.u32 %v562, 7
        %v564 = vsub.s32 %v561, %v563
        %v565 = vrot.slane %v557, %v564
        %v567 = vunpack.c.l.s4 1966171168
        %v568 = vunpack.c.0.s8 %v567
        %v569 = vlaneseq
        %v570 = vshrl.u32 %v569, 7
        %v571 = vsub.s32 %v568, %v570
        %v572 = vrot.slane %v565, %v571
        %s574 = scalar_lea.vmem %s222, 6
        %575 = vst.msk [vmem:[%s574] ss:$8 sm:$0x3] %vm298, %v572
        %576 = vst.msk [vmem:[%s574] ss:$8 sm:$0x0] %vm298, %v572
        %s577 = sld [smem:[#allocation2 + $0x1c]]
        %v578 = vstv %s577
        %v579 = vmul.f32 %v578, %v251
        %s580 = sld [smem:[#allocation2 + $0x1d]]
        %v581 = vstv %s580
        %v582 = vmul.f32 %v581, %v251
        %v584 = vrot.slane %v582, 5
        %v585 = vrot.slane %v584, 4
        %v587 = vadd.f32 %v579, %v585
        %s588 = sld [smem:[#allocation2 + $0x1e]]
        %v589 = vstv %s588
        %v590 = vmul.f32 %v589, %v251
        %v592 = vrot.slane %v590, 6
        %v593 = vrot.slane %v592, 4
        %v595 = vadd.f32 %v587, %v593
        %s596 = sld [smem:[#allocation2 + $0x1f]]
        %v597 = vstv %s596
        %v598 = vmul.f32 %v597, %v251
        %v600 = vrot.slane %v598, 7
        %v601 = vrot.slane %v600, 4
        %v603 = vadd.f32 %v595, %v601
        %v606 = vunpack.c.l.s4 1966171168
        %v607 = vunpack.c.0.s8 %v606
        %v608 = vlaneseq
        %v609 = vshrl.u32 %v608, 7
        %v610 = vsub.s32 %v607, %v609
        %v611 = vrot.slane %v603, %v610
        %v613 = vunpack.c.l.s4 1966171168
        %v614 = vunpack.c.0.s8 %v613
        %v615 = vlaneseq
        %v616 = vshrl.u32 %v615, 7
        %v617 = vsub.s32 %v614, %v616
        %v618 = vrot.slane %v611, %v617
        %s620 = scalar_lea.vmem %s222, 7
        %621 = vst.msk [vmem:[%s620] ss:$8 sm:$0x3] %vm298, %v618
        %622 = vst.msk [vmem:[%s620] ss:$8 sm:$0x0] %vm298, %v618
        %s623 = smul.u32 2, %s20
        %p624 = scmp.lt.s32.totalorder %s19, 1
        %s625 = scalar_select %p624, %s19, 1
        %p626 = scmp.lt.s32.totalorder %s623, 1
        %s627 = scalar_select %p626, %s623, 1
        %s628 = smul.addr %s625, 2
        %s629 = sadd.s32 %s627, %s628
        %s630 = smul.addr %s629, 8
        %s631 = scalar_lea.vmem %s3, %s630
        // Predicated region
        $region37: #{transition_forward.1} parent=31 // pred_check
          %p632 = pneg %p117
        $region38: #{transition_forward.1} parent=31 // pred_check_branch
          %634 = sbr.rel (%p632) target = $region40
        $region39: #{transition_forward.1} parent=31 // pred_region
          %s635 = smul.u32 2, %s20
        $region40: #{transition_forward.1} parent=31 // pred_fallthru
          _
      $region32: #{transition_forward.1} parent=5 // pred_fallthru
        _
      %p636 = scmp.le.s32.totalorder 2, %s10
      // Predicated region
      $region41: #{transition_forward.1} parent=5 // pred_check
        %p637 = pneg %p636
      $region42: #{transition_forward.1} parent=5 // pred_check_branch
        %639 = sbr.rel (%p637) target = $region44
      $region43: #{transition_forward.1} parent=5 // pred_region
        %s640 = ssub.s32 %s10, 2
        // Predicated region
        $region45: #{transition_forward.1} parent=43 // pred_check
          %p641 = pneg %p123
        $region46: #{transition_forward.1} parent=43 // pred_check_branch
          %643 = sbr.rel (%p641) target = $region48
        $region47: #{transition_forward.1} parent=43 // pred_region
          %s644 = smul.u32 2, %s22
          %p645 = scmp.lt.s32.totalorder %s21, 1
          %s646 = scalar_select %p645, %s21, 1
          %p647 = scmp.lt.s32.totalorder %s644, 1
          %s648 = scalar_select %p647, %s644, 1
          %s649 = smul.addr %s646, 2
          %s650 = sadd.s32 %s648, %s649
          %s651 = smul.addr %s650, 8
          %s652 = scalar_lea.vmem %s3, %s651
        $region48: #{transition_forward.1} parent=43 // pred_fallthru
          _
      $region44: #{transition_forward.1} parent=5 // pred_fallthru
        _
    $region6: #{transition_forward.1} parent=1 // loop_footer
      %s14 = sadd.s32 1, %s10
    $region7: #{transition_forward.1} parent=1 // loop_footer_branch
      %9 = sbr.rel target = $region3
    $region8: #{transition_forward.1} parent=1 // loop_exit
      _
    %653 = vsyncpa [#allocation3], 1
    %s654 = scalar_lea.sflag [#allocation3], 1
    %655 = vsyncpa %s654, 1

</llo_original>
